<compile_context>
chip_gen: v6e
topology: v6e:2x2x1
jax: 0.10.0
libtpu: 0.0.40
codegen_flags: <defaults>
</compile_context>

<pallas_src>
import functools

import jax
import jax.numpy as jnp
import numpy as np
from jax import lax
from jax.experimental import pallas as pl
from jax.experimental.pallas import tpu as pltpu


def _stats_kernel(x_ref, sq_ref, *, hw_total, need_mask, single_k):
    """Accumulate per-row [sum, sumsq] over the HW (lane) axis.

    sq_ref block is (row_t, 2): column 0 = sum(x), column 1 = sum(x*x).
    """
    x = x_ref[...].astype(jnp.float32)

    def _accum(xv, *, init):
        s = jnp.sum(xv, axis=1, keepdims=True)
        q = jnp.sum(xv * xv, axis=1, keepdims=True)
        if init:
            sq_ref[:, 0:1] = s
            sq_ref[:, 1:2] = q
        else:
            sq_ref[:, 0:1] += s
            sq_ref[:, 1:2] += q

    if single_k:
        # Whole HW extent fits one tile: no mask, no init+accumulate.
        _accum(x, init=True)
        return

    @pl.when(pl.program_id(1) == 0)
    def _():
        sq_ref[...] = jnp.zeros_like(sq_ref)

    if need_mask:
        k = pl.program_id(1)
        is_last = k == pl.num_programs(1) - 1

        # Mask padded lanes only on the trailing partial tile; interior tiles
        # take the cheap unmasked path (keeps pass 1 memory-bound on v7x/bf16).
        @pl.when(is_last)
        def _():
            hw_t = x.shape[1]
            lane = lax.broadcasted_iota(jnp.int32, x.shape, 1) + k * hw_t
            _accum(jnp.where(lane < hw_total, x, 0.0), init=False)

        @pl.when(jnp.logical_not(is_last))
        def _():
            _accum(x, init=False)
    else:
        _accum(x, init=False)


def _apply_kernel(x_ref, a_ref, b_ref, o_ref):
    """out = A * x + B with a per-row (per (n,c)) scale / shift."""
    x = x_ref[...].astype(jnp.float32)
    o_ref[...] = (a_ref[...] * x + b_ref[...]).astype(o_ref.dtype)


def _physical_vmem_bytes():
    """Physical VMEM capacity (128 MiB v5e/v6e, 64 MiB per TC on v7x)."""
    try:
        cap = int(getattr(pltpu.get_tpu_info(), "vmem_capacity_bytes", 0) or 0)
        if cap >= (32 << 20):
            return cap
    except Exception:
        pass
    return 128 << 20


def _pick_row_tile(r_total, row_tile_max=512):
    if r_total > row_tile_max:
        return row_tile_max
    # Split into >=2 row blocks when legal (multiple-of-8 blocks) so the
    # pass-1 "parallel" row axis can shard across v7x's two TensorCores.
    if r_total >= 16 and r_total % 8 == 0:
        return max(8, ((r_total // 2) // 8) * 8)
    return r_total


def _pick_hw_tile(hw_total, row_t, itemsize, n_bufs, budget_bytes, cap=8192):
    """Largest lane tile (multiple of 128, or the full extent) fitting budget."""
    if hw_total <= 128:
        return hw_total
    by_budget = budget_bytes // max(1, n_bufs * row_t * itemsize)
    t = min(cap, by_budget, hw_total)
    if t >= hw_total:
        return hw_total
    return int(max(128, (t // 128) * 128))


def batch_channel_norm_2d(x, bn_weight, bn_bias, weight, bias, *, num_groups,
                          eps=1e-5):
    """x: (N, C, H, W). Returns (N, C, H, W). Forward (training-mode stats)."""
    N, C, H, W = x.shape
    G = num_groups
    assert C % G == 0, "num_channels must be divisible by num_groups"
    Cg = C // G
    HW = H * W
    R = N * C

    x2 = x.reshape(R, HW)                     # rows = (n, c), lanes = spatial
    itemsize = jnp.dtype(x.dtype).itemsize

    # Generation-aware VMEM budget (re-derived per chip, no fixed 32 MiB cap).
    vmem_cap = _physical_vmem_bytes()
    usable = min((vmem_cap * 3) // 4, vmem_cap - (16 << 20))   # 96 MiB / 48 MiB
    tile_budget = max(usable - (8 << 20), 4 << 20)

    row_t = _pick_row_tile(R)
    num_r = pl.cdiv(R, row_t)
    # NOTE: when R % row_t != 0 the trailing row block reads OOB rows; their
    # (garbage) stats are never consumed and their output writes are dropped
    # by Pallas for the out-of-range region, so results stay correct.

    # Per-pass lane tiles: pass 1 double-buffers only x (2 buffers); pass 2
    # streams x in + out (4 buffers), so pass 1 gets a bigger tile for free.
    hw1_t = _pick_hw_tile(HW, row_t, itemsize, n_bufs=2, budget_bytes=tile_budget)
    hw2_t = _pick_hw_tile(HW, row_t, itemsize, n_bufs=4, budget_bytes=tile_budget)
    num_k1 = pl.cdiv(HW, hw1_t)
    num_k2 = pl.cdiv(HW, hw2_t)
    need_mask1 = (HW % hw1_t) != 0

    vmem1 = int(min(usable, 2 * row_t * hw1_t * itemsize + (8 << 20)))
    vmem2 = int(min(usable, 4 * row_t * hw2_t * itemsize + (8 << 20)))

    # ---- pass 1: per-(n,c) [sum, sumsq] over HW ------------------------------
    sq = pl.pallas_call(
        functools.partial(_stats_kernel, hw_total=HW, need_mask=need_mask1,
                          single_k=(num_k1 == 1)),
        out_shape=jax.ShapeDtypeStruct((R, 2), jnp.float32),
        grid=(num_r, num_k1),
        in_specs=[pl.BlockSpec((row_t, hw1_t), lambda r, k: (r, k))],
        out_specs=pl.BlockSpec((row_t, 2), lambda r, k: (r, 0)),
        compiler_params=pltpu.CompilerParams(
            dimension_semantics=("parallel", "arbitrary"),
            vmem_limit_bytes=vmem1),
    )(x2)

    # ---- fold BN + ChannelNorm + group affine into per-(n,c) A, B ------------
    # O(N*C) scalar glue; every statistic is derivable from sum / sumsq.
    # NOTE: variance uses E[x^2] - E[x]^2 in f32 (clamped at 0); for inputs
    # with |mean| >> std this is less accurate than the reference's two-pass
    # (x-mu)^2 formulation.
    S = sq[:, 0].reshape(N, G, Cg)
    Q = sq[:, 1].reshape(N, G, Cg)

    cnt_bn = float(N * HW)
    mu_c = jnp.sum(S, axis=0, keepdims=True) / cnt_bn                  # (1,G,Cg)
    var_c = jnp.maximum(jnp.sum(Q, axis=0, keepdims=True) / cnt_bn
                        - mu_c * mu_c, 0.0)                            # biased
    bn_w = bn_weight.astype(jnp.float32).reshape(1, G, Cg)
    bn_b = bn_bias.astype(jnp.float32).reshape(1, G, Cg)
    a1 = bn_w * lax.rsqrt(var_c + eps)        # BatchNorm:  xb = a1 * x + b1
    b1 = bn_b - a1 * mu_c

    cnt_g = float(Cg * HW)
    Sg = jnp.sum(a1 * S + b1 * HW, axis=2, keepdims=True)              # (N,G,1)
    Qg = jnp.sum(a1 * a1 * Q + 2.0 * a1 * b1 * S + b1 * b1 * HW,
                 axis=2, keepdims=True)
    mu_g = Sg / cnt_g
    var_g = jnp.maximum(Qg / cnt_g - mu_g * mu_g, 0.0)                 # biased
    rg = lax.rsqrt(var_g + eps)                                        # (N,G,1)

    wg = weight.astype(jnp.float32).reshape(1, G, 1)
    bg = bias.astype(jnp.float32).reshape(1, G, 1)
    A = (wg * rg * a1).reshape(R, 1)
    B = (wg * rg * (b1 - mu_g) + bg).reshape(R, 1)

    # ---- pass 2: fused elementwise apply  out = A*x + B ----------------------
    out2 = pl.pallas_call(
        _apply_kernel,
        out_shape=jax.ShapeDtypeStruct((R, HW), x.dtype),
        grid=(num_r, num_k2),
        in_specs=[pl.BlockSpec((row_t, hw2_t), lambda r, k: (r, k)),
                  pl.BlockSpec((row_t, 1), lambda r, k: (r, 0)),
                  pl.BlockSpec((row_t, 1), lambda r, k: (r, 0))],
        out_specs=pl.BlockSpec((row_t, hw2_t), lambda r, k: (r, k)),
        compiler_params=pltpu.CompilerParams(
            dimension_semantics=("parallel", "parallel"),
            vmem_limit_bytes=vmem2),
    )(x2, A, B)

    # TODO(synk): running_mean / running_var momentum update of the inner
    # BatchNorm2d (module state side effect) is not emitted; forward math only.
    return out2.reshape(N, C, H, W)


def _reference(x, bn_w, bn_b, w, b, G, eps):
    """Pure-JAX transcription of the PyTorch forward (training mode)."""
    N, C, H, W = x.shape
    mu = x.mean(axis=(0, 2, 3), keepdims=True)
    var = ((x - mu) ** 2).mean(axis=(0, 2, 3), keepdims=True)
    xb = (x - mu) / jnp.sqrt(var + eps)
    xb = xb * bn_w.reshape(1, C, 1, 1) + bn_b.reshape(1, C, 1, 1)
    xr = xb.reshape(1, N * G, -1)
    mu2 = xr.mean(axis=(0, 2), keepdims=True)
    var2 = ((xr - mu2) ** 2).mean(axis=(0, 2), keepdims=True)
    xn = ((xr - mu2) / jnp.sqrt(var2 + eps)).reshape(N, G, -1)
    out = w.reshape(1, G, 1) * xn + b.reshape(1, G, 1)
    return out.reshape(N, C, H, W)


if __name__ == "__main__":
    N, C, H, W = 2, 4, 16, 16
    G = 2
    eps = 1e-5

    key = jax.random.PRNGKey(0)
    kx, kw1, kb1, kw2, kb2 = jax.random.split(key, 5)
    x = jax.random.normal(kx, (N, C, H, W), dtype=jnp.float32)

    # Check 1: reset_parameters() init (bn.weight=1, bn.bias=0, weight=1, bias=0).
    bn_weight = jnp.ones((C,), jnp.float32)
    bn_bias = jnp.zeros((C,), jnp.float32)
    weight = jnp.ones((1, G, 1), jnp.float32)
    bias = jnp.zeros((1, G, 1), jnp.float32)

    out = jax.block_until_ready(
        batch_channel_norm_2d(x, bn_weight, bn_bias, weight, bias,
                              num_groups=G, eps=eps))
    ref = _reference(x, bn_weight, bn_bias, weight, bias, G, eps)
    np.testing.assert_allclose(np.asarray(out), np.asarray(ref),
                               rtol=1e-4, atol=1e-4)

    # Check 2: non-trivial affine params (exercises the folded A/B math).
    bn_weight = 0.5 + jax.random.uniform(kw1, (C,), jnp.float32)
    bn_bias = 0.1 * jax.random.normal(kb1, (C,), jnp.float32)
    weight = 0.5 + jax.random.uniform(kw2, (1, G, 1), jnp.float32)
    bias = 0.1 * jax.random.normal(kb2, (1, G, 1), jnp.float32)

    out = jax.block_until_ready(
        batch_channel_norm_2d(x, bn_weight, bn_bias, weight, bias,
                              num_groups=G, eps=eps))
    ref = _reference(x, bn_weight, bn_bias, weight, bias, G, eps)
    np.testing.assert_allclose(np.asarray(out), np.asarray(ref),
                               rtol=1e-4, atol=1e-4)

    print("KERNEL_OK")
</pallas_src>

<mosaic_0001>
module attributes {stable_mosaic.version = 11 : i64} {
  func.func @_stats_kernel(%arg0: i32, %arg1: i32, %arg2: memref<8x256xf32, #tpu.memory_space<vmem>>, %arg3: memref<8x2xf32, #tpu.memory_space<vmem>>) attributes {dimension_semantics = [#tpu.dimension_semantics<parallel>, #tpu.dimension_semantics<arbitrary>], iteration_bounds = array<i64: 1, 1>, scalar_prefetch = 0 : i64, scratch_operands = 0 : i64, tpu.core_type = #tpu.core_type<tc>, window_params = [{transform_indices = @transform_0, window_bounds = array<i64: 8, 256>}, {transform_indices = @transform_1, window_bounds = array<i64: 8, 2>}]} {
    %c0 = arith.constant 0 : index
    %c0_0 = arith.constant 0 : index
    %0 = vector.load %arg2[%c0, %c0_0] : memref<8x256xf32, #tpu.memory_space<vmem>>, vector<8x256xf32>
    %cst = arith.constant dense<0.000000e+00> : vector<8xf32>
    %1 = vector.multi_reduction <add>, %0, %cst [1] : vector<8x256xf32> to vector<8xf32>
    %2 = vector.shape_cast %1 : vector<8xf32> to vector<8x1xf32>
    %3 = arith.mulf %0, %0 : vector<8x256xf32>
    %cst_1 = arith.constant dense<0.000000e+00> : vector<8xf32>
    %4 = vector.multi_reduction <add>, %3, %cst_1 [1] : vector<8x256xf32> to vector<8xf32>
    %5 = vector.shape_cast %4 : vector<8xf32> to vector<8x1xf32>
    %c0_2 = arith.constant 0 : index
    %c0_3 = arith.constant 0 : index
    %6 = vector.load %arg3[%c0_2, %c0_3] : memref<8x2xf32, #tpu.memory_space<vmem>>, vector<8x1xf32>
    tpu.vector_store %arg3[%c0_2, %c0_3], %2 {strides = array<i32>} : memref<8x2xf32, #tpu.memory_space<vmem>>, vector<8x1xf32>,
    %c0_4 = arith.constant 0 : index
    %c1 = arith.constant 1 : index
    %7 = vector.load %arg3[%c0_4, %c1] : memref<8x2xf32, #tpu.memory_space<vmem>>, vector<8x1xf32>
    tpu.vector_store %arg3[%c0_4, %c1], %5 {strides = array<i32>} : memref<8x2xf32, #tpu.memory_space<vmem>>, vector<8x1xf32>,
    return
  }
  func.func @transform_0(%arg0: i32, %arg1: i32) -> (i32, i32) {
    %c0_i32 = arith.constant 0 : i32
    return %arg0, %arg1 : i32, i32
  }
  func.func @transform_1(%arg0: i32, %arg1: i32) -> (i32, i32) {
    %c0_i32 = arith.constant 0 : i32
    %c0_i32_0 = arith.constant 0 : i32
    return %arg0, %c0_i32 : i32, i32
  }
}

</mosaic_0001>

<llo_original>
// kernel: tpu_custom_call.1
$region0: #{tpu_custom_call.1}
  #allocation0 [shape = 'u32[]', space=smem, size = 0x4, offset = 0x4, fixed_abs, tag = 'smem constant byte address 0x4 - core index']
  #allocation1 [shape = 'u32[144,128]{1,0:T(1,128)}', space=vmem, size = 0x12000, scoped, tag = 'internal scratch']
  %s0 = inlined_call_operand.hbm [shape: f32[8,256], index: 0, kind: input, shape index: {}]
  %s1 = inlined_call_operand.vmem [shape: f32[8,2], index: 1, kind: output, shape index: {}]
  %s2 = sld [smem:[#allocation0]]
  $region18: #{tpu_custom_call.1} parent=0
    _
  %s4 = ssub.s32 1, %s2
  %s5 = scalar_select 0, %s4, %s2
  $region1: #{tpu_custom_call.1} parent=0
    #allocation2 [shape = 'u8[8192]{0}', space=vmem, size = 0x2000, scoped, tag = 'input window, operand 0, single buffered']
    #allocation3 [shape = 's32[1]{0}', space=sflag, size = 0x4, scoped, tag = 'scoped memory for tpu_custom_call.1']
    %6 = vsyncpa [#allocation3], 0
    // Predicated region
    $region2: #{tpu_custom_call.1} parent=1 // pred_check
      _
    $region3: #{tpu_custom_call.1} parent=1 // pred_check_branch
      %8 = sbr.rel (0) target = $region5
    $region4: #{tpu_custom_call.1} parent=1 // pred_region
      %s10 = ssub.s32 256, 256
      %11 = vsyncadd [#allocation3], %s10
      %s13 = sshll.u32 [#allocation2], 4
      %s14 = int_to_ptr.vmem [resolvable:$true] %s13
      %16 = dma.hbm_to_vmem [thread:$0]  %s0, 256, %s14, [#allocation3]
    $region5: #{tpu_custom_call.1} parent=1 // pred_fallthru
      _
    // Predicated region
    $region6: #{tpu_custom_call.1} parent=1 // pred_check
      _
    $region7: #{tpu_custom_call.1} parent=1 // pred_check_branch
      %18 = sbr.rel (0) target = $region9
    $region8: #{tpu_custom_call.1} parent=1 // pred_region
      %19 = dma.done [#allocation3], 256
    $region9: #{tpu_custom_call.1} parent=1 // pred_fallthru
      _
    %v20 = vld [vmem:[#allocation2] sm:$0xff]
    %v21 = vld [vmem:[#allocation2 + $0x8] sm:$0xff]
    %v22 = vadd.f32 %v20, %v21
    %23 = vadd.xlane.f32.xlu0 %v22
    %v24 = vpop.xlane.xlu0 %23
    %v25 = vmul.f32 %v20, %v20
    %v26 = vmul.f32 %v21, %v21
    %v27 = vadd.f32 %v25, %v26
    %28 = vadd.xlane.f32.xlu0 %v27
    %v29 = vpop.xlane.xlu0 %28
    %vm30 = vcmask 7168
    %31 = vst.msk [vmem:[%s1] sm:$0xff] %vm30, %v24
    %vm32 = vcmask 15368
    %33 = vst.msk [vmem:[%s1] sm:$0xff] %vm32, %v29
    // Predicated region
    $region10: #{tpu_custom_call.1} parent=1 // pred_check
      _
    $region11: #{tpu_custom_call.1} parent=1 // pred_check_branch
      %35 = sbr.rel (0) target = $region13
    $region12: #{tpu_custom_call.1} parent=1 // pred_region
      _
    $region13: #{tpu_custom_call.1} parent=1 // pred_fallthru
      _
    // Predicated region
    $region14: #{tpu_custom_call.1} parent=1 // pred_check
      _
    $region15: #{tpu_custom_call.1} parent=1 // pred_check_branch
      %37 = sbr.rel (0) target = $region17
    $region16: #{tpu_custom_call.1} parent=1 // pred_region
      _
    $region17: #{tpu_custom_call.1} parent=1 // pred_fallthru
      _
    %38 = vsyncpa [#allocation3], 1

</llo_original>
